<compile_context>
chip_gen: v5e
topology: v5e:2x2
jax: 0.10.0
libtpu: 0.0.40
codegen_flags: <defaults>
</compile_context>

<pallas_src>
import functools

import jax
import jax.numpy as jnp
from jax.experimental import pallas as pl
from jax.experimental.pallas import tpu as pltpu


def _round_up(x, m):
    return (x + m - 1) // m * m


def _deconv3d_bn_relu_kernel(x0_ref, x1_ref, x2_ref, w_ref, scale_ref, shift_ref,
                             out_ref, xk_ref, *, wp, cin, lchunk, nchunks, unroll):
    # x0/x1/x2_ref: (Cin_p, Lin)      bf16 padded input planes z, z+1, z+2
    # w_ref:        (9, Cout, 3*Cin_p) bf16 tap-major, spatially-flipped weights
    # scale_ref:    (Cout, 1) f32     gamma / sqrt(running_var + eps)
    # shift_ref:    (Cout, 1) f32     beta - running_mean * scale
    # out_ref:      (Cout, Lout) f32  one flattened output plane (row stride wp)
    # xk_ref:       (3*Cin_p, Lin) bf16 VMEM scratch: depth-(K)-stacked input slab
    f32 = jnp.float32

    # Stage the 3 depth-tap planes as one K-stacked slab so each spatial tap becomes
    # a single MXU dot with contraction K = 3*Cin_p (offsets are 8-row aligned).
    xk_ref[0 * cin:1 * cin, :] = x0_ref[...]
    xk_ref[1 * cin:2 * cin, :] = x1_ref[...]
    xk_ref[2 * cin:3 * cin, :] = x2_ref[...]

    # Hoisted per-grid-step loads (reused by every tap / lane chunk).
    w_taps = [w_ref[t] for t in range(9)]      # each (Cout, 3*Cin_p) bf16
    scale = scale_ref[...]                     # (Cout, 1) f32
    shift = shift_ref[...]                     # (Cout, 1) f32
    cout = w_taps[0].shape[0]

    def chunk_body(base):
        acc = jnp.zeros((cout, lchunk), f32)
        for b in range(3):
            for c in range(3):
                # spatial tap (b, c) -> pure lane shift of the K-stacked slab
                xs = xk_ref[:, pl.ds(base + b * wp + c, lchunk)]   # (3*Cin_p, lchunk)
                acc = acc + jnp.dot(w_taps[b * 3 + c], xs,
                                    preferred_element_type=f32)
        y = acc * scale + shift                                    # fused BN (eval)
        out_ref[:, pl.ds(base, lchunk)] = jnp.maximum(y, 0.0).astype(out_ref.dtype)

    if unroll:
        for j in range(nchunks):
            chunk_body(j * lchunk)             # static, lane-aligned chunk starts
    else:
        def body(j, carry):
            chunk_body(pl.multiple_of(j * lchunk, 128))
            return carry
        jax.lax.fori_loop(0, nchunks, body, 0)


def deconv3d_unit_forward(x, weight, gamma, beta, running_mean, running_var,
                          eps=1e-5):
    """Deconv3dUnit forward (ConvTranspose3d k=3 s=1 no-bias -> BN3d eval -> ReLU).

    x:      (N, Cin, D, H, W)
    weight: (Cin, Cout, 3, 3, 3)   -- PyTorch ConvTranspose3d layout
    returns (N, Cout, D+2, H+2, W+2)
    """
    N, Cin, D, H, W = x.shape
    Cin_w, Cout, kD, kH, kW = weight.shape
    assert (kD, kH, kW) == (3, 3, 3) and Cin_w == Cin

    Do, Ho, Wo = D + 2, H + 2, W + 2
    Dp, Hp, Wp = D + 4, H + 4, W + 4
    Cin_p = _round_up(Cin, 8)                  # aligned K-stacking / scratch stores

    # ---- lane-dense flattening of (H, W) and lane-chunk sizing -------------------
    rows = Ho * Wp                             # valid flattened output lanes
    if rows <= 512:
        lchunk = _round_up(rows, 128)
        Lout = lchunk
    else:
        lchunk = 512                           # keeps the f32 accumulator small
        Lout = _round_up(rows, lchunk)
    nchunks = Lout // lchunk
    unroll = nchunks <= 8
    Lin = _round_up(Lout + 2 * Wp + 2, 128)    # covers the largest tap shift

    # ---- wrapper-side (XLA) layout prep: cheap, done once per call ---------------
    # pad spatially by k-1 = 2 so the transposed conv becomes a VALID correlation
    xp = jnp.pad(x, ((0, 0), (0, 0), (2, 2), (2, 2), (2, 2)))
    xf = xp.reshape(N, Cin, Dp, Hp * Wp)                       # flatten (Hp,Wp)
    xf = jnp.pad(xf, ((0, 0), (0, Cin_p - Cin), (0, 0), (0, Lin - Hp * Wp)))
    xf = jnp.transpose(xf, (0, 2, 1, 3)).astype(jnp.bfloat16)  # (N, Dp, Cin_p, Lin)

    # tap-major, spatially flipped, depth-(K)-stacked weights (bf16 for the MXU):
    #   w9[b*3 + c, o, a*Cin_p + i] = weight[i, o, 2-a, 2-b, 2-c]
    wf = jnp.flip(weight, axis=(2, 3, 4))
    wf = jnp.pad(wf, ((0, Cin_p - Cin), (0, 0), (0, 0), (0, 0), (0, 0)))
    w9 = jnp.transpose(wf, (3, 4, 1, 2, 0)).reshape(9, Cout, 3 * Cin_p)
    w9 = w9.astype(jnp.bfloat16)

    # BatchNorm (eval) folded to a single per-channel affine, kept in f32 in the
    # epilogue (folding scale into the bf16 weights would add extra rounding).
    scale_v = (gamma / jnp.sqrt(running_var + eps)).astype(jnp.float32)
    shift_v = (beta - running_mean * scale_v).astype(jnp.float32)
    scale = scale_v.reshape(Cout, 1)
    shift = shift_v.reshape(Cout, 1)

    kernel = functools.partial(_deconv3d_bn_relu_kernel, wp=Wp, cin=Cin_p,
                               lchunk=lchunk, nchunks=nchunks, unroll=unroll)

    grid_spec = pltpu.PrefetchScalarGridSpec(
        num_scalar_prefetch=0,
        grid=(N, Do),                                          # both axes parallel
        in_specs=[
            # the 3-plane depth halo of the same array (block indices z, z+1, z+2)
            pl.BlockSpec((None, None, Cin_p, Lin), lambda n, z: (n, z, 0, 0)),
            pl.BlockSpec((None, None, Cin_p, Lin), lambda n, z: (n, z + 1, 0, 0)),
            pl.BlockSpec((None, None, Cin_p, Lin), lambda n, z: (n, z + 2, 0, 0)),
            pl.BlockSpec((9, Cout, 3 * Cin_p), lambda n, z: (0, 0, 0)),   # weights
            pl.BlockSpec((Cout, 1), lambda n, z: (0, 0)),                 # BN scale
            pl.BlockSpec((Cout, 1), lambda n, z: (0, 0)),                 # BN shift
        ],
        out_specs=pl.BlockSpec((None, None, Cout, Lout), lambda n, z: (n, z, 0, 0)),
        scratch_shapes=[pltpu.VMEM((3 * Cin_p, Lin), jnp.bfloat16)],
    )

    out_flat = pl.pallas_call(
        kernel,
        out_shape=jax.ShapeDtypeStruct((N, Do, Cout, Lout), jnp.float32),
        grid_spec=grid_spec,
        compiler_params=pltpu.CompilerParams(
            dimension_semantics=("parallel", "parallel"),
            vmem_limit_bytes=48 * 1024 * 1024,                 # fits v7x's 64 MiB too
        ),
    )(xf, xf, xf, w9, scale, shift)

    # un-flatten rows, strip row-wrap / lane padding, back to NCDHW
    out = out_flat[..., :Ho * Wp].reshape(N, Do, Cout, Ho, Wp)[..., :Wo]
    return jnp.transpose(out, (0, 2, 1, 3, 4)).astype(x.dtype)


def reference_deconv3d_unit(x, weight, gamma, beta, running_mean, running_var,
                            eps=1e-5):
    """Pure-JAX reference matching the PyTorch forward (k=3, s=1, bn eval, relu)."""
    wf = jnp.flip(weight, axis=(2, 3, 4))      # ConvTranspose == conv w/ flipped k
    y = jax.lax.conv_general_dilated(
        x.astype(jnp.float32), wf.astype(jnp.float32),
        window_strides=(1, 1, 1),
        padding=[(2, 2)] * 3,
        dimension_numbers=('NCDHW', 'IODHW', 'NCDHW'))
    scale = gamma / jnp.sqrt(running_var + eps)
    shift = beta - running_mean * scale
    y = y * scale[None, :, None, None, None] + shift[None, :, None, None, None]
    return jnp.maximum(y, 0.0)


if __name__ == "__main__":
    key = jax.random.PRNGKey(0)
    k1, k2, k3, k4, k5, k6 = jax.random.split(key, 6)
    N, Cin, Cout, D, H, W = 2, 4, 8, 8, 8, 8

    def bf16_exact(a):
        # keep test values exactly bf16-representable so any MXU precision mode agrees
        return a.astype(jnp.bfloat16).astype(jnp.float32)

    x = bf16_exact(jax.random.normal(k1, (N, Cin, D, H, W), dtype=jnp.float32))
    weight = bf16_exact(jax.random.normal(k2, (Cin, Cout, 3, 3, 3), dtype=jnp.float32) * 0.2)
    gamma = bf16_exact(jax.random.uniform(k3, (Cout,), minval=0.5, maxval=1.5))
    beta = bf16_exact(jax.random.normal(k4, (Cout,)) * 0.1)
    running_mean = bf16_exact(jax.random.normal(k5, (Cout,)) * 0.1)
    running_var = bf16_exact(jax.random.uniform(k6, (Cout,), minval=0.5, maxval=1.5))

    out = deconv3d_unit_forward(x, weight, gamma, beta, running_mean, running_var)
    out = jax.block_until_ready(out)

    ref = reference_deconv3d_unit(x, weight, gamma, beta, running_mean, running_var)
    assert out.shape == (N, Cout, D + 2, H + 2, W + 2), out.shape
    assert jnp.allclose(out, ref, atol=1e-3, rtol=1e-3), \
        float(jnp.max(jnp.abs(out - ref)))
    print("KERNEL_OK")
</pallas_src>

<mosaic_0001>
module attributes {stable_mosaic.version = 11 : i64} {
  func.func @_deconv3d_bn_relu_kernel(%arg0: i32, %arg1: i32, %arg2: memref<1x1x8x256xbf16, #tpu.memory_space<vmem>>, %arg3: memref<1x1x8x256xbf16, #tpu.memory_space<vmem>>, %arg4: memref<1x1x8x256xbf16, #tpu.memory_space<vmem>>, %arg5: memref<9x8x24xbf16, #tpu.memory_space<vmem>>, %arg6: memref<8x1xf32, #tpu.memory_space<vmem>>, %arg7: memref<8x1xf32, #tpu.memory_space<vmem>>, %arg8: memref<1x1x8x128xf32, #tpu.memory_space<vmem>>, %arg9: memref<24x256xbf16, #tpu.memory_space<vmem>>) attributes {dimension_semantics = [#tpu.dimension_semantics<parallel>, #tpu.dimension_semantics<parallel>], iteration_bounds = array<i64: 2, 10>, scalar_prefetch = 0 : i64, scratch_operands = 1 : i64, tpu.core_type = #tpu.core_type<tc>, window_params = [{transform_indices = @transform_0, window_bounds = array<i64: 1, 1, 8, 256>}, {transform_indices = @transform_1, window_bounds = array<i64: 1, 1, 8, 256>}, {transform_indices = @transform_2, window_bounds = array<i64: 1, 1, 8, 256>}, {pipeline_mode = #tpu.pipeline_mode<synchronous>, transform_indices = @transform_3, window_bounds = array<i64: 9, 8, 24>}, {pipeline_mode = #tpu.pipeline_mode<synchronous>, transform_indices = @transform_4, window_bounds = array<i64: 8, 1>}, {pipeline_mode = #tpu.pipeline_mode<synchronous>, transform_indices = @transform_5, window_bounds = array<i64: 8, 1>}, {transform_indices = @transform_6, window_bounds = array<i64: 1, 1, 8, 128>}]} {
    %c0 = arith.constant 0 : index
    %c0_0 = arith.constant 0 : index
    %c0_1 = arith.constant 0 : index
    %c0_2 = arith.constant 0 : index
    %0 = vector.load %arg2[%c0, %c0_0, %c0_1, %c0_2] : memref<1x1x8x256xbf16, #tpu.memory_space<vmem>>, vector<1x1x8x256xbf16>
    %1 = vector.shape_cast %0 : vector<1x1x8x256xbf16> to vector<8x256xbf16>
    %c0_3 = arith.constant 0 : index
    %c0_4 = arith.constant 0 : index
    %2 = vector.load %arg9[%c0_3, %c0_4] : memref<24x256xbf16, #tpu.memory_space<vmem>>, vector<8x256xbf16>
    tpu.vector_store %arg9[%c0_3, %c0_4], %1 {strides = array<i32>} : memref<24x256xbf16, #tpu.memory_space<vmem>>, vector<8x256xbf16>,
    %c0_5 = arith.constant 0 : index
    %c0_6 = arith.constant 0 : index
    %c0_7 = arith.constant 0 : index
    %c0_8 = arith.constant 0 : index
    %3 = vector.load %arg3[%c0_5, %c0_6, %c0_7, %c0_8] : memref<1x1x8x256xbf16, #tpu.memory_space<vmem>>, vector<1x1x8x256xbf16>
    %4 = vector.shape_cast %3 : vector<1x1x8x256xbf16> to vector<8x256xbf16>
    %c8 = arith.constant 8 : index
    %c0_9 = arith.constant 0 : index
    %5 = vector.load %arg9[%c8, %c0_9] : memref<24x256xbf16, #tpu.memory_space<vmem>>, vector<8x256xbf16>
    tpu.vector_store %arg9[%c8, %c0_9], %4 {strides = array<i32>} : memref<24x256xbf16, #tpu.memory_space<vmem>>, vector<8x256xbf16>,
    %c0_10 = arith.constant 0 : index
    %c0_11 = arith.constant 0 : index
    %c0_12 = arith.constant 0 : index
    %c0_13 = arith.constant 0 : index
    %6 = vector.load %arg4[%c0_10, %c0_11, %c0_12, %c0_13] : memref<1x1x8x256xbf16, #tpu.memory_space<vmem>>, vector<1x1x8x256xbf16>
    %7 = vector.shape_cast %6 : vector<1x1x8x256xbf16> to vector<8x256xbf16>
    %c16 = arith.constant 16 : index
    %c0_14 = arith.constant 0 : index
    %8 = vector.load %arg9[%c16, %c0_14] : memref<24x256xbf16, #tpu.memory_space<vmem>>, vector<8x256xbf16>
    tpu.vector_store %arg9[%c16, %c0_14], %7 {strides = array<i32>} : memref<24x256xbf16, #tpu.memory_space<vmem>>, vector<8x256xbf16>,
    %c0_15 = arith.constant 0 : index
    %c0_16 = arith.constant 0 : index
    %c0_17 = arith.constant 0 : index
    %9 = vector.load %arg5[%c0_15, %c0_16, %c0_17] : memref<9x8x24xbf16, #tpu.memory_space<vmem>>, vector<1x8x24xbf16>
    %10 = vector.shape_cast %9 : vector<1x8x24xbf16> to vector<8x24xbf16>
    %c1 = arith.constant 1 : index
    %c0_18 = arith.constant 0 : index
    %c0_19 = arith.constant 0 : index
    %11 = vector.load %arg5[%c1, %c0_18, %c0_19] : memref<9x8x24xbf16, #tpu.memory_space<vmem>>, vector<1x8x24xbf16>
    %12 = vector.shape_cast %11 : vector<1x8x24xbf16> to vector<8x24xbf16>
    %c2 = arith.constant 2 : index
    %c0_20 = arith.constant 0 : index
    %c0_21 = arith.constant 0 : index
    %13 = vector.load %arg5[%c2, %c0_20, %c0_21] : memref<9x8x24xbf16, #tpu.memory_space<vmem>>, vector<1x8x24xbf16>
    %14 = vector.shape_cast %13 : vector<1x8x24xbf16> to vector<8x24xbf16>
    %c3 = arith.constant 3 : index
    %c0_22 = arith.constant 0 : index
    %c0_23 = arith.constant 0 : index
    %15 = vector.load %arg5[%c3, %c0_22, %c0_23] : memref<9x8x24xbf16, #tpu.memory_space<vmem>>, vector<1x8x24xbf16>
    %16 = vector.shape_cast %15 : vector<1x8x24xbf16> to vector<8x24xbf16>
    %c4 = arith.constant 4 : index
    %c0_24 = arith.constant 0 : index
    %c0_25 = arith.constant 0 : index
    %17 = vector.load %arg5[%c4, %c0_24, %c0_25] : memref<9x8x24xbf16, #tpu.memory_space<vmem>>, vector<1x8x24xbf16>
    %18 = vector.shape_cast %17 : vector<1x8x24xbf16> to vector<8x24xbf16>
    %c5 = arith.constant 5 : index
    %c0_26 = arith.constant 0 : index
    %c0_27 = arith.constant 0 : index
    %19 = vector.load %arg5[%c5, %c0_26, %c0_27] : memref<9x8x24xbf16, #tpu.memory_space<vmem>>, vector<1x8x24xbf16>
    %20 = vector.shape_cast %19 : vector<1x8x24xbf16> to vector<8x24xbf16>
    %c6 = arith.constant 6 : index
    %c0_28 = arith.constant 0 : index
    %c0_29 = arith.constant 0 : index
    %21 = vector.load %arg5[%c6, %c0_28, %c0_29] : memref<9x8x24xbf16, #tpu.memory_space<vmem>>, vector<1x8x24xbf16>
    %22 = vector.shape_cast %21 : vector<1x8x24xbf16> to vector<8x24xbf16>
    %c7 = arith.constant 7 : index
    %c0_30 = arith.constant 0 : index
    %c0_31 = arith.constant 0 : index
    %23 = vector.load %arg5[%c7, %c0_30, %c0_31] : memref<9x8x24xbf16, #tpu.memory_space<vmem>>, vector<1x8x24xbf16>
    %24 = vector.shape_cast %23 : vector<1x8x24xbf16> to vector<8x24xbf16>
    %c8_32 = arith.constant 8 : index
    %c0_33 = arith.constant 0 : index
    %c0_34 = arith.constant 0 : index
    %25 = vector.load %arg5[%c8_32, %c0_33, %c0_34] : memref<9x8x24xbf16, #tpu.memory_space<vmem>>, vector<1x8x24xbf16>
    %26 = vector.shape_cast %25 : vector<1x8x24xbf16> to vector<8x24xbf16>
    %c0_35 = arith.constant 0 : index
    %c0_36 = arith.constant 0 : index
    %27 = vector.load %arg6[%c0_35, %c0_36] : memref<8x1xf32, #tpu.memory_space<vmem>>, vector<8x1xf32>
    %c0_37 = arith.constant 0 : index
    %c0_38 = arith.constant 0 : index
    %28 = vector.load %arg7[%c0_37, %c0_38] : memref<8x1xf32, #tpu.memory_space<vmem>>, vector<8x1xf32>
    %cst = arith.constant 0.000000e+00 : f32
    %29 = vector.broadcast %cst : f32 to vector<8x128xf32>
    %c0_39 = arith.constant 0 : index
    %c0_40 = arith.constant 0 : index
    %30 = vector.load %arg9[%c0_39, %c0_40] : memref<24x256xbf16, #tpu.memory_space<vmem>>, vector<24x128xbf16>
    %cst_41 = arith.constant dense<0.000000e+00> : vector<8x128xf32>
    %31 = tpu.matmul %10, %30, %cst_41 {dimension_numbers = #tpu.dot_dimension_numbers<[1], [0], [0], [1], [0, 0, 1, 1], [], []>} : vector<8x24xbf16>, vector<24x128xbf16>, vector<8x128xf32> -> vector<8x128xf32>
    %32 = arith.addf %29, %31 : vector<8x128xf32>
    %c0_42 = arith.constant 0 : index
    %c1_43 = arith.constant 1 : index
    %33 = vector.load %arg9[%c0_42, %c1_43] : memref<24x256xbf16, #tpu.memory_space<vmem>>, vector<24x128xbf16>
    %cst_44 = arith.constant dense<0.000000e+00> : vector<8x128xf32>
    %34 = tpu.matmul %12, %33, %cst_44 {dimension_numbers = #tpu.dot_dimension_numbers<[1], [0], [0], [1], [0, 0, 1, 1], [], []>} : vector<8x24xbf16>, vector<24x128xbf16>, vector<8x128xf32> -> vector<8x128xf32>
    %35 = arith.addf %32, %34 : vector<8x128xf32>
    %c0_45 = arith.constant 0 : index
    %c2_46 = arith.constant 2 : index
    %36 = vector.load %arg9[%c0_45, %c2_46] : memref<24x256xbf16, #tpu.memory_space<vmem>>, vector<24x128xbf16>
    %cst_47 = arith.constant dense<0.000000e+00> : vector<8x128xf32>
    %37 = tpu.matmul %14, %36, %cst_47 {dimension_numbers = #tpu.dot_dimension_numbers<[1], [0], [0], [1], [0, 0, 1, 1], [], []>} : vector<8x24xbf16>, vector<24x128xbf16>, vector<8x128xf32> -> vector<8x128xf32>
    %38 = arith.addf %35, %37 : vector<8x128xf32>
    %c0_48 = arith.constant 0 : index
    %c12 = arith.constant 12 : index
    %39 = vector.load %arg9[%c0_48, %c12] : memref<24x256xbf16, #tpu.memory_space<vmem>>, vector<24x128xbf16>
    %cst_49 = arith.constant dense<0.000000e+00> : vector<8x128xf32>
    %40 = tpu.matmul %16, %39, %cst_49 {dimension_numbers = #tpu.dot_dimension_numbers<[1], [0], [0], [1], [0, 0, 1, 1], [], []>} : vector<8x24xbf16>, vector<24x128xbf16>, vector<8x128xf32> -> vector<8x128xf32>
    %41 = arith.addf %38, %40 : vector<8x128xf32>
    %c0_50 = arith.constant 0 : index
    %c13 = arith.constant 13 : index
    %42 = vector.load %arg9[%c0_50, %c13] : memref<24x256xbf16, #tpu.memory_space<vmem>>, vector<24x128xbf16>
    %cst_51 = arith.constant dense<0.000000e+00> : vector<8x128xf32>
    %43 = tpu.matmul %18, %42, %cst_51 {dimension_numbers = #tpu.dot_dimension_numbers<[1], [0], [0], [1], [0, 0, 1, 1], [], []>} : vector<8x24xbf16>, vector<24x128xbf16>, vector<8x128xf32> -> vector<8x128xf32>
    %44 = arith.addf %41, %43 : vector<8x128xf32>
    %c0_52 = arith.constant 0 : index
    %c14 = arith.constant 14 : index
    %45 = vector.load %arg9[%c0_52, %c14] : memref<24x256xbf16, #tpu.memory_space<vmem>>, vector<24x128xbf16>
    %cst_53 = arith.constant dense<0.000000e+00> : vector<8x128xf32>
    %46 = tpu.matmul %20, %45, %cst_53 {dimension_numbers = #tpu.dot_dimension_numbers<[1], [0], [0], [1], [0, 0, 1, 1], [], []>} : vector<8x24xbf16>, vector<24x128xbf16>, vector<8x128xf32> -> vector<8x128xf32>
    %47 = arith.addf %44, %46 : vector<8x128xf32>
    %c0_54 = arith.constant 0 : index
    %c24 = arith.constant 24 : index
    %48 = vector.load %arg9[%c0_54, %c24] : memref<24x256xbf16, #tpu.memory_space<vmem>>, vector<24x128xbf16>
    %cst_55 = arith.constant dense<0.000000e+00> : vector<8x128xf32>
    %49 = tpu.matmul %22, %48, %cst_55 {dimension_numbers = #tpu.dot_dimension_numbers<[1], [0], [0], [1], [0, 0, 1, 1], [], []>} : vector<8x24xbf16>, vector<24x128xbf16>, vector<8x128xf32> -> vector<8x128xf32>
    %50 = arith.addf %47, %49 : vector<8x128xf32>
    %c0_56 = arith.constant 0 : index
    %c25 = arith.constant 25 : index
    %51 = vector.load %arg9[%c0_56, %c25] : memref<24x256xbf16, #tpu.memory_space<vmem>>, vector<24x128xbf16>
    %cst_57 = arith.constant dense<0.000000e+00> : vector<8x128xf32>
    %52 = tpu.matmul %24, %51, %cst_57 {dimension_numbers = #tpu.dot_dimension_numbers<[1], [0], [0], [1], [0, 0, 1, 1], [], []>} : vector<8x24xbf16>, vector<24x128xbf16>, vector<8x128xf32> -> vector<8x128xf32>
    %53 = arith.addf %50, %52 : vector<8x128xf32>
    %c0_58 = arith.constant 0 : index
    %c26 = arith.constant 26 : index
    %54 = vector.load %arg9[%c0_58, %c26] : memref<24x256xbf16, #tpu.memory_space<vmem>>, vector<24x128xbf16>
    %cst_59 = arith.constant dense<0.000000e+00> : vector<8x128xf32>
    %55 = tpu.matmul %26, %54, %cst_59 {dimension_numbers = #tpu.dot_dimension_numbers<[1], [0], [0], [1], [0, 0, 1, 1], [], []>} : vector<8x24xbf16>, vector<24x128xbf16>, vector<8x128xf32> -> vector<8x128xf32>
    %56 = arith.addf %53, %55 : vector<8x128xf32>
    %57 = vector.broadcast %27 : vector<8x1xf32> to vector<8x128xf32>
    %58 = arith.mulf %56, %57 : vector<8x128xf32>
    %59 = vector.broadcast %28 : vector<8x1xf32> to vector<8x128xf32>
    %60 = arith.addf %58, %59 : vector<8x128xf32>
    %cst_60 = arith.constant 0.000000e+00 : f32
    %61 = vector.broadcast %cst_60 : f32 to vector<8x128xf32>
    %62 = arith.maximumf %60, %61 : vector<8x128xf32>
    %c0_61 = arith.constant 0 : index
    %c0_62 = arith.constant 0 : index
    %c0_63 = arith.constant 0 : index
    %c0_64 = arith.constant 0 : index
    %63 = vector.load %arg8[%c0_61, %c0_62, %c0_63, %c0_64] : memref<1x1x8x128xf32, #tpu.memory_space<vmem>>, vector<1x1x8x128xf32>
    %64 = vector.shape_cast %63 : vector<1x1x8x128xf32> to vector<8x128xf32>
    %65 = vector.shape_cast %62 : vector<8x128xf32> to vector<1x1x8x128xf32>
    tpu.vector_store %arg8[%c0_61, %c0_62, %c0_63, %c0_64], %65 {strides = array<i32>} : memref<1x1x8x128xf32, #tpu.memory_space<vmem>>, vector<1x1x8x128xf32>,
    return
  }
  func.func @transform_0(%arg0: i32, %arg1: i32) -> (i32, i32, i32, i32) {
    %c0_i32 = arith.constant 0 : i32
    %c0_i32_0 = arith.constant 0 : i32
    %c0_i32_1 = arith.constant 0 : i32
    return %arg0, %arg1, %c0_i32, %c0_i32_0 : i32, i32, i32, i32
  }
  func.func @transform_1(%arg0: i32, %arg1: i32) -> (i32, i32, i32, i32) {
    %c1_i32 = arith.constant 1 : i32
    %0 = arith.addi %arg1, %c1_i32 : i32
    %c0_i32 = arith.constant 0 : i32
    %c0_i32_0 = arith.constant 0 : i32
    %c0_i32_1 = arith.constant 0 : i32
    return %arg0, %0, %c0_i32, %c0_i32_0 : i32, i32, i32, i32
  }
  func.func @transform_2(%arg0: i32, %arg1: i32) -> (i32, i32, i32, i32) {
    %c2_i32 = arith.constant 2 : i32
    %0 = arith.addi %arg1, %c2_i32 : i32
    %c0_i32 = arith.constant 0 : i32
    %c0_i32_0 = arith.constant 0 : i32
    %c0_i32_1 = arith.constant 0 : i32
    return %arg0, %0, %c0_i32, %c0_i32_0 : i32, i32, i32, i32
  }
  func.func @transform_3(%arg0: i32, %arg1: i32) -> (i32, i32, i32) {
    %c0_i32 = arith.constant 0 : i32
    %c0_i32_0 = arith.constant 0 : i32
    %c0_i32_1 = arith.constant 0 : i32
    %c0_i32_2 = arith.constant 0 : i32
    return %c0_i32, %c0_i32_0, %c0_i32_1 : i32, i32, i32
  }
  func.func @transform_4(%arg0: i32, %arg1: i32) -> (i32, i32) {
    %c0_i32 = arith.constant 0 : i32
    %c0_i32_0 = arith.constant 0 : i32
    %c0_i32_1 = arith.constant 0 : i32
    return %c0_i32, %c0_i32_0 : i32, i32
  }
  func.func @transform_5(%arg0: i32, %arg1: i32) -> (i32, i32) {
    %c0_i32 = arith.constant 0 : i32
    %c0_i32_0 = arith.constant 0 : i32
    %c0_i32_1 = arith.constant 0 : i32
    return %c0_i32, %c0_i32_0 : i32, i32
  }
  func.func @transform_6(%arg0: i32, %arg1: i32) -> (i32, i32, i32, i32) {
    %c0_i32 = arith.constant 0 : i32
    %c0_i32_0 = arith.constant 0 : i32
    %c0_i32_1 = arith.constant 0 : i32
    return %arg0, %arg1, %c0_i32, %c0_i32_0 : i32, i32, i32, i32
  }
}

</mosaic_0001>

<llo_original>
// kernel: tpu_custom_call.1
$region0: #{tpu_custom_call.1}
  #allocation0 [shape = 'u32[]', space=smem, size = 0x4, offset = 0x4, fixed_abs, tag = 'smem constant byte address 0x4 - core index']
  #allocation1 [shape = 'u32[72,128]{1,0:T(1,128)}', space=vmem, size = 0x9000, scoped, tag = 'internal scratch']
  #allocation2 [shape = 'bf16[24,256]{1,0:T(8,128)(2,1)}', space=vmem, size = 0x3000, scoped, tag = 'scratch operand']
  %s0 = inlined_call_operand.hbm [shape: bf16[2,12,8,256], index: 0, kind: input, shape index: {}]
  %s1 = inlined_call_operand.hbm [shape: bf16[2,12,8,256], index: 1, kind: input, shape index: {}]
  %s2 = inlined_call_operand.hbm [shape: bf16[2,12,8,256], index: 2, kind: input, shape index: {}]
  %s3 = inlined_call_operand.hbm [shape: bf16[9,8,24], index: 3, kind: input, shape index: {}]
  %s4 = inlined_call_operand.vmem [shape: f32[8,1], index: 4, kind: input, shape index: {}]
  %s5 = inlined_call_operand.vmem [shape: f32[8,1], index: 5, kind: input, shape index: {}]
  %s6 = inlined_call_operand.hbm [shape: f32[2,10,8,128], index: 6, kind: output, shape index: {}]
  %s7 = sld [smem:[#allocation0]]
  $region73: #{tpu_custom_call.1} parent=0
    _
  %s9 = ssub.s32 1, %s7
  %s10 = scalar_select 0, %s9, %s7
  $region1: #{tpu_custom_call.1} parent=0
    #allocation3 [shape = 'u8[8192]{0}', space=vmem, size = 0x2000, scoped, tag = 'input window, operand 0']
    #allocation4 [shape = 's32[2]{0}', space=sflag, size = 0x8, scoped, tag = 'scoped memory for tpu_custom_call.1']
    #allocation5 [shape = 's32[2]{0}', space=sflag, size = 0x8, scoped, tag = 'scoped memory for tpu_custom_call.1']
    #allocation6 [shape = 'u8[8192]{0}', space=vmem, size = 0x2000, scoped, tag = 'input window, operand 1']
    #allocation7 [shape = 's32[2]{0}', space=sflag, size = 0x8, scoped, tag = 'scoped memory for tpu_custom_call.1']
    #allocation8 [shape = 'u8[8192]{0}', space=vmem, size = 0x2000, scoped, tag = 'input window, operand 2']
    #allocation9 [shape = 'u8[18432]{0}', space=vmem, size = 0x4800, scoped, tag = 'input window, operand 3, single buffered']
    #allocation10 [shape = 's32[1]{0}', space=sflag, size = 0x4, scoped, tag = 'scoped memory for tpu_custom_call.1']
    #allocation11 [shape = 'u8[8192]{0}', space=vmem, size = 0x2000, scoped, tag = 'output window, operand 0']
    %11 = vsyncpa [#allocation4], 0
    %s12 = scalar_lea.sflag [#allocation4], 1
    %13 = vsyncpa %s12, 0
    %14 = vsyncpa [#allocation7], 0
    %s15 = scalar_lea.sflag [#allocation7], 1
    %16 = vsyncpa %s15, 0
    %17 = vsyncpa [#allocation10], 0
    %18 = vsyncpa [#allocation5], 0
    %s19 = scalar_lea.sflag [#allocation5], 1
    %20 = vsyncpa %s19, 0
    loop: start=0, step=1, limit=22
    $region2: #{tpu_custom_call.1} parent=1 // loop_pre_header
      _
    $region3: #{tpu_custom_call.1} parent=1 // loop_header
      %s22 = sphi 0, %s26
      %p23 = scmp.ge.s32.totalorder %s22, 22
      %s29 = sphi 0, %s41
      %s30 = sphi 0, %s37
      %s31 = sphi 0, %s29
      %s32 = sphi 0, %s30
      %s33 = sphi 0, %s31
      %s34 = sphi 0, %s32
      %s46 = sphi 0, %s48
      %s49 = sphi 0, %s46
      %s50 = sphi 0, %s49
      %s66 = sphi 0, %s50
      %s76 = sphi 0, %s78
      %s79 = sphi 0, %s76
      %s80 = sphi 0, %s79
      %s96 = sphi 0, %s80
      %s106 = sphi 0, %s108
      %s109 = sphi 0, %s106
      %s110 = sphi 0, %s109
      %s126 = sphi 0, %s110
      %s130 = sphi 0, %s130
      %s132 = sphi 0, %s130
      %s133 = sphi 0, %s132
      %s147 = sphi 0, %s133
      %s151 = sphi 0, %s151
      %s153 = sphi 0, %s151
      %s154 = sphi 0, %s153
      %s168 = sphi 0, %s154
      %s172 = sphi 0, %s172
      %s174 = sphi 0, %s172
      %s175 = sphi 0, %s174
      %s189 = sphi 0, %s175
      %s197 = sphi 0, %s199
      %s200 = sphi 0, %s197
      %s201 = sphi 0, %s200
      %s217 = sphi 0, %s201
    $region4: #{tpu_custom_call.1} parent=1 // loop_header_branch
      %25 = sbr.rel (%p23) target = $region8
    $region5: #{tpu_custom_call.1} parent=1 // loop_body
      %s27 = ssub.s32 %s22, 1
      %s28 = ssub.s32 %s22, 2
      %s35 = sadd.s32 1, %s30
      %p36 = scmp.ge.s32.totalorder %s35, 10
      %s37 = scalar_select %p36, 0, %s35
      %s38 = sadd.s32 1, %s29
      %s39 = scalar_select %p36, %s38, %s29
      %p40 = scmp.ge.s32.totalorder %s39, 2
      %s41 = scalar_select %p40, 0, %s39
      %s42 = ssub.s32 %s29, %s41
      %s43 = ssub.s32 %s30, %s37
      %s44 = sor.u32 %s42, %s43
      %p45 = scmp.eq.s32.totalorder %s44, 0
      %s47 = sadd.s32 %s46, 1
      %s48 = scalar_select %p45, %s46, %s47
      %p51 = pneg %p45
      %p52 = scmp.eq.s32.totalorder %s22, 19
      %p53 = por %p51, %p52
      %p54 = scmp.ne.s32.totalorder %s46, %s49
      %p55 = scmp.eq.s32.totalorder %s22, 0
      %p56 = por %p54, %p55
      %p57 = scmp.ne.s32.totalorder %s46, %s49
      %p58 = scmp.eq.s32.totalorder %s27, 19
      %p59 = por %p57, %p58
      %p60 = scmp.ne.s32.totalorder %s49, %s50
      %p61 = scmp.eq.s32.totalorder %s27, 0
      %p62 = por %p60, %p61
      %p63 = scmp.ne.s32.totalorder %s49, %s50
      %p64 = scmp.eq.s32.totalorder %s28, 19
      %p65 = por %p63, %p64
      %p67 = scmp.ne.s32.totalorder %s50, %s66
      %p68 = scmp.eq.s32.totalorder %s28, 0
      %p69 = por %p67, %p68
      %s70 = sadd.s32 %s30, 1
      %s71 = sadd.s32 %s37, 1
      %s72 = ssub.s32 %s29, %s41
      %s73 = ssub.s32 %s70, %s71
      %s74 = sor.u32 %s72, %s73
      %p75 = scmp.eq.s32.totalorder %s74, 0
      %s77 = sadd.s32 %s76, 1
      %s78 = scalar_select %p75, %s76, %s77
      %p81 = pneg %p75
      %p82 = scmp.eq.s32.totalorder %s22, 19
      %p83 = por %p81, %p82
      %p84 = scmp.ne.s32.totalorder %s76, %s79
      %p85 = scmp.eq.s32.totalorder %s22, 0
      %p86 = por %p84, %p85
      %p87 = scmp.ne.s32.totalorder %s76, %s79
      %p88 = scmp.eq.s32.totalorder %s27, 19
      %p89 = por %p87, %p88
      %p90 = scmp.ne.s32.totalorder %s79, %s80
      %p91 = scmp.eq.s32.totalorder %s27, 0
      %p92 = por %p90, %p91
      %p93 = scmp.ne.s32.totalorder %s79, %s80
      %p94 = scmp.eq.s32.totalorder %s28, 19
      %p95 = por %p93, %p94
      %p97 = scmp.ne.s32.totalorder %s80, %s96
      %p98 = scmp.eq.s32.totalorder %s28, 0
      %p99 = por %p97, %p98
      %s100 = sadd.s32 %s30, 2
      %s101 = sadd.s32 %s37, 2
      %s102 = ssub.s32 %s29, %s41
      %s103 = ssub.s32 %s100, %s101
      %s104 = sor.u32 %s102, %s103
      %p105 = scmp.eq.s32.totalorder %s104, 0
      %s107 = sadd.s32 %s106, 1
      %s108 = scalar_select %p105, %s106, %s107
      %p111 = pneg %p105
      %p112 = scmp.eq.s32.totalorder %s22, 19
      %p113 = por %p111, %p112
      %p114 = scmp.ne.s32.totalorder %s106, %s109
      %p115 = scmp.eq.s32.totalorder %s22, 0
      %p116 = por %p114, %p115
      %p117 = scmp.ne.s32.totalorder %s106, %s109
      %p118 = scmp.eq.s32.totalorder %s27, 19
      %p119 = por %p117, %p118
      %p120 = scmp.ne.s32.totalorder %s109, %s110
      %p121 = scmp.eq.s32.totalorder %s27, 0
      %p122 = por %p120, %p121
      %p123 = scmp.ne.s32.totalorder %s109, %s110
      %p124 = scmp.eq.s32.totalorder %s28, 19
      %p125 = por %p123, %p124
      %p127 = scmp.ne.s32.totalorder %s110, %s126
      %p128 = scmp.eq.s32.totalorder %s28, 0
      %p129 = por %p127, %p128
      %s131 = sadd.s32 %s130, 1
      %p134 = scmp.eq.s32.totalorder %s22, 19
      %p135 = scmp.ne.s32.totalorder %s130, %s132
      %p136 = scmp.eq.s32.totalorder %s22, 0
      %p137 = por %p135, %p136
      %p138 = scmp.ne.s32.totalorder %s130, %s132
      %p139 = scmp.eq.s32.totalorder %s27, 19
      %p140 = por %p138, %p139
      %p141 = scmp.ne.s32.totalorder %s132, %s133
      %p142 = scmp.eq.s32.totalorder %s27, 0
      %p143 = por %p141, %p142
      %p144 = scmp.ne.s32.totalorder %s132, %s133
      %p145 = scmp.eq.s32.totalorder %s28, 19
      %p146 = por %p144, %p145
      %p148 = scmp.ne.s32.totalorder %s133, %s147
      %p149 = scmp.eq.s32.totalorder %s28, 0
      %p150 = por %p148, %p149
      %s152 = sadd.s32 %s151, 1
      %p155 = scmp.eq.s32.totalorder %s22, 19
      %p156 = scmp.ne.s32.totalorder %s151, %s153
      %p157 = scmp.eq.s32.totalorder %s22, 0
      %p158 = por %p156, %p157
      %p159 = scmp.ne.s32.totalorder %s151, %s153
      %p160 = scmp.eq.s32.totalorder %s27, 19
      %p161 = por %p159, %p160
      %p162 = scmp.ne.s32.totalorder %s153, %s154
      %p163 = scmp.eq.s32.totalorder %s27, 0
      %p164 = por %p162, %p163
      %p165 = scmp.ne.s32.totalorder %s153, %s154
      %p166 = scmp.eq.s32.totalorder %s28, 19
      %p167 = por %p165, %p166
      %p169 = scmp.ne.s32.totalorder %s154, %s168
      %p170 = scmp.eq.s32.totalorder %s28, 0
      %p171 = por %p169, %p170
      %s173 = sadd.s32 %s172, 1
      %p176 = scmp.eq.s32.totalorder %s22, 19
      %p177 = scmp.ne.s32.totalorder %s172, %s174
      %p178 = scmp.eq.s32.totalorder %s22, 0
      %p179 = por %p177, %p178
      %p180 = scmp.ne.s32.totalorder %s172, %s174
      %p181 = scmp.eq.s32.totalorder %s27, 19
      %p182 = por %p180, %p181
      %p183 = scmp.ne.s32.totalorder %s174, %s175
      %p184 = scmp.eq.s32.totalorder %s27, 0
      %p185 = por %p183, %p184
      %p186 = scmp.ne.s32.totalorder %s174, %s175
      %p187 = scmp.eq.s32.totalorder %s28, 19
      %p188 = por %p186, %p187
      %p190 = scmp.ne.s32.totalorder %s175, %s189
      %p191 = scmp.eq.s32.totalorder %s28, 0
      %p192 = por %p190, %p191
      %s193 = ssub.s32 %s29, %s41
      %s194 = ssub.s32 %s30, %s37
      %s195 = sor.u32 %s193, %s194
      %p196 = scmp.eq.s32.totalorder %s195, 0
      %s198 = sadd.s32 %s197, 1
      %s199 = scalar_select %p196, %s197, %s198
      %p202 = pneg %p196
      %p203 = scmp.eq.s32.totalorder %s22, 19
      %p204 = por %p202, %p203
      %p205 = scmp.ne.s32.totalorder %s197, %s200
      %p206 = scmp.eq.s32.totalorder %s22, 0
      %p207 = por %p205, %p206
      %p208 = scmp.ne.s32.totalorder %s197, %s200
      %p209 = scmp.eq.s32.totalorder %s27, 19
      %p210 = por %p208, %p209
      %p211 = scmp.ne.s32.totalorder %s200, %s201
      %p212 = scmp.eq.s32.totalorder %s27, 0
      %p213 = por %p211, %p212
      %p214 = scmp.ne.s32.totalorder %s200, %s201
      %p215 = scmp.eq.s32.totalorder %s28, 19
      %p216 = por %p214, %p215
      %p218 = scmp.ne.s32.totalorder %s201, %s217
      %p219 = scmp.eq.s32.totalorder %s28, 0
      %p220 = por %p218, %p219
      %p221 = scmp.le.s32.totalorder 1, %s22
      %p222 = scmp.lt.s32.totalorder %s22, 21
      %p223 = pnand %p221, %p222
      %p224 = pneg %p223
      // Predicated region
      $region9: #{tpu_custom_call.1} parent=5 // pred_check
        _
      $region10: #{tpu_custom_call.1} parent=5 // pred_check_branch
        %226 = sbr.rel (%p223) target = $region12
      $region11: #{tpu_custom_call.1} parent=5 // pred_region
        %s227 = ssub.s32 %s22, 1
        // Predicated region
        $region13: #{tpu_custom_call.1} parent=11 // pred_check
          %p228 = pneg %p143
        $region14: #{tpu_custom_call.1} parent=11 // pred_check_branch
          %230 = sbr.rel (%p228) target = $region16
        $region15: #{tpu_custom_call.1} parent=11 // pred_region
          %232 = vsyncadd [#allocation10], 0
          %s233 = sshll.u32 %s3, 4
          %s234 = int_to_ptr.hbm [resolvable:$true] %s233
          %s235 = sshll.u32 [#allocation9], 4
          %s236 = int_to_ptr.vmem [resolvable:$true] %s235
          %241 = dma.hbm_to_vmem [thread:$0]  %s234, 576, %s236, [#allocation10], 64, 64, 4
        $region16: #{tpu_custom_call.1} parent=11 // pred_fallthru
          _
        // Predicated region
        $region17: #{tpu_custom_call.1} parent=11 // pred_check
          %p242 = pneg %p164
        $region18: #{tpu_custom_call.1} parent=11 // pred_check_branch
          %244 = sbr.rel (%p242) target = $region20
        $region19: #{tpu_custom_call.1} parent=11 // pred_region
          _
        $region20: #{tpu_custom_call.1} parent=11 // pred_fallthru
          _
        // Predicated region
        $region21: #{tpu_custom_call.1} parent=11 // pred_check
          %p245 = pneg %p185
        $region22: #{tpu_custom_call.1} parent=11 // pred_check_branch
          %247 = sbr.rel (%p245) target = $region24
        $region23: #{tpu_custom_call.1} parent=11 // pred_region
          _
        $region24: #{tpu_custom_call.1} parent=11 // pred_fallthru
          _
      $region12: #{tpu_custom_call.1} parent=5 // pred_fallthru
        _
      %p248 = scmp.lt.s32.totalorder %s22, 20
      // Predicated region
      $region25: #{tpu_custom_call.1} parent=5 // pred_check
        %p249 = pneg %p248
      $region26: #{tpu_custom_call.1} parent=5 // pred_check_branch
        %251 = sbr.rel (%p249) target = $region28
      $region27: #{tpu_custom_call.1} parent=5 // pred_region
        // Predicated region
        $region29: #{tpu_custom_call.1} parent=27 // pred_check
          %p252 = pneg %p56
        $region30: #{tpu_custom_call.1} parent=27 // pred_check_branch
          %254 = sbr.rel (%p252) target = $region32
        $region31: #{tpu_custom_call.1} parent=27 // pred_region
          %s255 = sand.u32 %s46, 1
          %s256 = scalar_lea.sflag [#allocation4], %s255
          %s257 = sand.u32 %s46, 1
          %s258 = smul.addr %s257, 8
          %s259 = scalar_lea.vmem [#allocation3], %s258
          %261 = vsyncadd %s256, 0
          %s262 = smul.addr %s30, 2
          %s263 = smul.addr %s29, 24
          %s264 = sadd.s32 %s262, %s263
          %s265 = smul.addr %s264, 4
          %s266 = scalar_lea.hbm %s0, %s265
          %s268 = sshll.u32 %s266, 4
          %s269 = int_to_ptr.hbm [resolvable:$true] %s268
          %s270 = sshll.u32 %s259, 4
          %s271 = int_to_ptr.vmem [resolvable:$true] %s270
          %273 = dma.hbm_to_vmem [thread:$0]  %s269, 128, %s271, %s256
        $region32: #{tpu_custom_call.1} parent=27 // pred_fallthru
          _
        // Predicated region
        $region33: #{tpu_custom_call.1} parent=27 // pred_check
          %p274 = pneg %p86
        $region34: #{tpu_custom_call.1} parent=27 // pred_check_branch
          %276 = sbr.rel (%p274) target = $region36
        $region35: #{tpu_custom_call.1} parent=27 // pred_region
          %s277 = sand.u32 %s22, 1
          %s278 = scalar_lea.sflag [#allocation7], %s277
          %s279 = sand.u32 %s76, 1
          %s280 = smul.addr %s279, 8
          %s281 = scalar_lea.vmem [#allocation6], %s280
          %s282 = sadd.s32 %s30, 1
          %284 = vsyncadd %s278, 0
          %s285 = smul.addr %s282, 2
          %s286 = smul.addr %s29, 24
          %s287 = sadd.s32 %s285, %s286
          %s288 = smul.addr %s287, 4
          %s289 = scalar_lea.hbm %s1, %s288
          %s291 = sshll.u32 %s289, 4
          %s292 = int_to_ptr.hbm [resolvable:$true] %s291
          %s293 = sshll.u32 %s281, 4
          %s294 = int_to_ptr.vmem [resolvable:$true] %s293
          %296 = dma.hbm_to_vmem [thread:$0]  %s292, 128, %s294, %s278
        $region36: #{tpu_custom_call.1} parent=27 // pred_fallthru
          _
        // Predicated region
        $region37: #{tpu_custom_call.1} parent=27 // pred_check
          %p297 = pneg %p116
        $region38: #{tpu_custom_call.1} parent=27 // pred_check_branch
          %299 = sbr.rel (%p297) target = $region40
        $region39: #{tpu_custom_call.1} parent=27 // pred_region
          %s300 = sand.u32 %s22, 1
          %s301 = scalar_lea.sflag [#allocation7], %s300
          %s302 = sand.u32 %s106, 1
          %s303 = smul.addr %s302, 8
          %s304 = scalar_lea.vmem [#allocation8], %s303
          %s305 = sadd.s32 %s30, 2
          %307 = vsyncadd %s301, 0
          %s308 = smul.addr %s305, 2
          %s309 = smul.addr %s29, 24
          %s310 = sadd.s32 %s308, %s309
          %s311 = smul.addr %s310, 4
          %s312 = scalar_lea.hbm %s2, %s311
          %s314 = sshll.u32 %s312, 4
          %s315 = int_to_ptr.hbm [resolvable:$true] %s314
          %s316 = sshll.u32 %s304, 4
          %s317 = int_to_ptr.vmem [resolvable:$true] %s316
          %319 = dma.hbm_to_vmem [thread:$0]  %s315, 128, %s317, %s301
        $region40: #{tpu_custom_call.1} parent=27 // pred_fallthru
          _
      $region28: #{tpu_custom_call.1} parent=5 // pred_fallthru
        _
      %p320 = scmp.le.s32.totalorder 1, %s22
      %p321 = scmp.lt.s32.totalorder %s22, 21
      %p322 = pnand %p320, %p321
      %p323 = pneg %p322
      // Predicated region
      $region41: #{tpu_custom_call.1} parent=5 // pred_check
        _
      $region42: #{tpu_custom_call.1} parent=5 // pred_check_branch
        %325 = sbr.rel (%p322) target = $region44
      $region43: #{tpu_custom_call.1} parent=5 // pred_region
        %s326 = ssub.s32 %s22, 1
        %s327 = sand.u32 %s49, 1
        %s328 = scalar_lea.sflag [#allocation4], %s327
        %s329 = sand.u32 %s49, 1
        %s330 = smul.addr %s329, 8
        %s331 = scalar_lea.vmem [#allocation3], %s330
        // Predicated region
        $region45: #{tpu_custom_call.1} parent=43 // pred_check
          %p332 = pneg %p62
        $region46: #{tpu_custom_call.1} parent=43 // pred_check_branch
          %334 = sbr.rel (%p332) target = $region48
        $region47: #{tpu_custom_call.1} parent=43 // pred_region
          %336 = dma.done %s328, 128
        $region48: #{tpu_custom_call.1} parent=43 // pred_fallthru
          _
        %s337 = sand.u32 %s27, 1
        %s338 = scalar_lea.sflag [#allocation7], %s337
        %s339 = sand.u32 %s79, 1
        %s340 = smul.addr %s339, 8
        %s341 = scalar_lea.vmem [#allocation6], %s340
        // Predicated region
        $region49: #{tpu_custom_call.1} parent=43 // pred_check
          %p342 = pneg %p92
        $region50: #{tpu_custom_call.1} parent=43 // pred_check_branch
          %344 = sbr.rel (%p342) target = $region52
        $region51: #{tpu_custom_call.1} parent=43 // pred_region
          %346 = dma.done %s338, 128
        $region52: #{tpu_custom_call.1} parent=43 // pred_fallthru
          _
        %s347 = sand.u32 %s27, 1
        %s348 = scalar_lea.sflag [#allocation7], %s347
        %s349 = sand.u32 %s109, 1
        %s350 = smul.addr %s349, 8
        %s351 = scalar_lea.vmem [#allocation8], %s350
        // Predicated region
        $region53: #{tpu_custom_call.1} parent=43 // pred_check
          %p352 = pneg %p122
        $region54: #{tpu_custom_call.1} parent=43 // pred_check_branch
          %354 = sbr.rel (%p352) target = $region56
        $region55: #{tpu_custom_call.1} parent=43 // pred_region
          %356 = dma.done %s348, 128
        $region56: #{tpu_custom_call.1} parent=43 // pred_fallthru
          _
        // Predicated region
        $region57: #{tpu_custom_call.1} parent=43 // pred_check
          %p357 = pneg %p143
        $region58: #{tpu_custom_call.1} parent=43 // pred_check_branch
          %359 = sbr.rel (%p357) target = $region60
        $region59: #{tpu_custom_call.1} parent=43 // pred_region
          %361 = dma.done [#allocation10], 576
        $region60: #{tpu_custom_call.1} parent=43 // pred_fallthru
          _
        %s362 = sand.u32 %s49, 1
        %s363 = scalar_lea.sflag [#allocation4], %s362
        %s364 = sand.u32 %s49, 1
        %s365 = smul.addr %s364, 8
        %s366 = scalar_lea.vmem [#allocation3], %s365
        %p367 = pneg %p62
        %p368 = pneg %p59
        %s369 = sand.u32 %s27, 1
        %s370 = scalar_lea.sflag [#allocation7], %s369
        %s371 = sand.u32 %s79, 1
        %s372 = smul.addr %s371, 8
        %s373 = scalar_lea.vmem [#allocation6], %s372
        %p374 = pneg %p92
        %p375 = pneg %p89
        %s376 = sand.u32 %s27, 1
        %s377 = scalar_lea.sflag [#allocation7], %s376
        %s378 = sand.u32 %s109, 1
        %s379 = smul.addr %s378, 8
        %s380 = scalar_lea.vmem [#allocation8], %s379
        %p381 = pneg %p122
        %p382 = pneg %p119
        %p383 = pneg %p143
        %p384 = pneg %p140
        %p385 = pneg %p164
        %p386 = pneg %p161
        %p387 = pneg %p185
        %p388 = pneg %p182
        %p389 = pneg %p213
        %p390 = pneg %p210
        %s391 = sand.u32 %s200, 1
        %s392 = scalar_lea.sflag [#allocation5], %s391
        %s393 = sand.u32 %s200, 1
        %s394 = smul.addr %s393, 8
        %s395 = scalar_lea.vmem [#allocation11], %s394
        %s396 = sadd.s32 %s32, 1
        %s397 = sadd.s32 %s32, 2
        %v399 = vld [vmem:[%s331] sm:$0xff]
        %400 = vst [vmem:[#allocation2] sm:$0xff] %v399
        %v401 = vld [vmem:[%s341] sm:$0xff]
        %402 = vst [vmem:[#allocation2 + $0x8] sm:$0xff] %v401
        %v403 = vld [vmem:[%s351] sm:$0xff]
        %404 = vst [vmem:[#allocation2 + $0x10] sm:$0xff] %v403
        %v405 = vld [vmem:[#allocation9] sm:$0xf]
        %s406 = scalar_lea.vmem [#allocation9], 4
        %v407 = vld [vmem:[%s406] sm:$0xf]
        %s408 = scalar_lea.vmem [#allocation9], 8
        %v409 = vld [vmem:[%s408] sm:$0xf]
        %s410 = scalar_lea.vmem [#allocation9], 12
        %v411 = vld [vmem:[%s410] sm:$0xf]
        %s412 = scalar_lea.vmem [#allocation9], 16
        %v413 = vld [vmem:[%s412] sm:$0xf]
        %s414 = scalar_lea.vmem [#allocation9], 20
        %v415 = vld [vmem:[%s414] sm:$0xf]
        %s416 = scalar_lea.vmem [#allocation9], 24
        %v417 = vld [vmem:[%s416] sm:$0xf]
        %s418 = scalar_lea.vmem [#allocation9], 28
        %v419 = vld [vmem:[%s418] sm:$0xf]
        %s420 = scalar_lea.vmem [#allocation9], 32
        %v421 = vld [vmem:[%s420] sm:$0xf]
        %v422 = vld [vmem:[%s4] sm:$0xff]
        %v423 = vld [vmem:[%s5] sm:$0xff]
        %v424 = vld [vmem:[#allocation2] sm:$0xf]
        %v425 = vld [vmem:[#allocation2 + $0x8] sm:$0xf]
        %v426 = vld [vmem:[#allocation2 + $0x10] sm:$0xf]
        %v427 = vld [vmem:[#allocation2] sm:$0xff]
        %v428 = vld [vmem:[#allocation2 + $0x8] sm:$0xff]
        %v429 = vld [vmem:[#allocation2 + $0x10] sm:$0xff]
        %v433 = vunpack.c.l.b16 %v427
        %v434 = vunpack.c.h.b16 %v427
        %v435 = vunpack.c.l.b16 %v428
        %v436 = vunpack.c.h.b16 %v428
        %v437 = vunpack.c.l.b16 %v429
        %v438 = vunpack.c.h.b16 %v429
        %v439 = vpack.c.b16 %v435, %v433
        %v440 = vpack.c.b16 %v436, %v434
        %v441 = vpack.c.b16 %v437, %v437
        %v442 = vpack.c.b16 %v438, %v438
        %443 = vrot.lane.b32.xlu0 %v439, 127
        %v444 = vpop.permute.xlu0 %443
        %445 = vrot.lane.b32.xlu0 %v440, 127
        %v446 = vpop.permute.xlu0 %445
        %447 = vrot.lane.b32.xlu0 %v441, 127
        %v448 = vpop.permute.xlu0 %447
        %449 = vrot.lane.b32.xlu0 %v442, 127
        %v450 = vpop.permute.xlu0 %449
        %vm451 = vcmask 1039360
        %v452 = vsel %vm451, %v444, %v446
        %v453 = vsel %vm451, %v448, %v450
        %vm455 = vcmask 195584
        %v457 = vsel %vm455, %v407, 0
        %vm459 = vcmask 1043456
        %v461 = vsel %vm459, %v453, 0
        %463 = vmatpush.bf16.msra.mxu0 0
        %464 = vmatpush.bf16.msra.mxu0 0
        %465 = vmatpush.bf16.msra.mxu0 0
        %466 = vmatpush.bf16.msra.mxu0 0
        %467 = vmatpush.bf16.msra.mxu0 0
        %468 = vmatpush.bf16.msra.mxu0 0
        %469 = vmatpush.bf16.msra.mxu0 %v461
        %470 = vmatpush.bf16.msra.mxu0 %v452
        %471 = vmatmul.bf16.gmra.mxu0 %v457
        %v472 = vpop.f32.mrf.mxu0
        %v473 = vadd.f32 0.0, %v472
        %v474 = vpop.f32.mrf.mxu0
        %475 = vdwg.mxu0
        %v479 = vunpack.c.l.b16 %v424
        %v480 = vunpack.c.l.b16 %v425
        %v481 = vunpack.c.l.b16 %v426
        %v482 = vpack.c.b16 %v480, %v479
        %v483 = vpack.c.b16 %v481, %v481
        %v486 = vsel %vm455, %v405, 0
        %v489 = vsel %vm459, %v483, 0
        %491 = vmatpush.bf16.msra.mxu0 0
        %492 = vmatpush.bf16.msra.mxu0 0
        %493 = vmatpush.bf16.msra.mxu0 0
        %494 = vmatpush.bf16.msra.mxu0 0
        %495 = vmatpush.bf16.msra.mxu0 0
        %496 = vmatpush.bf16.msra.mxu0 0
        %497 = vmatpush.bf16.msra.mxu0 %v489
        %498 = vmatpush.bf16.msra.mxu0 %v482
        %499 = vmatmul.bf16.gmra.mxu0 %v486
        %v500 = vpop.f32.mrf.mxu0
        %v501 = vadd.f32 %v473, %v500
        %v502 = vpop.f32.mrf.mxu0
        %503 = vdwg.mxu0
        %504 = vrot.lane.b32.xlu0 %v439, 126
        %v505 = vpop.permute.xlu0 %504
        %506 = vrot.lane.b32.xlu0 %v440, 126
        %v507 = vpop.permute.xlu0 %506
        %508 = vrot.lane.b32.xlu0 %v441, 126
        %v509 = vpop.permute.xlu0 %508
        %510 = vrot.lane.b32.xlu0 %v442, 126
        %v511 = vpop.permute.xlu0 %510
        %vm512 = vcmask 1031168
        %v513 = vsel %vm512, %v505, %v507
        %v514 = vsel %vm512, %v509, %v511
        %v517 = vsel %vm455, %v409, 0
        %v520 = vsel %vm459, %v514, 0
        %522 = vmatpush.bf16.msra.mxu0 0
        %523 = vmatpush.bf16.msra.mxu0 0
        %524 = vmatpush.bf16.msra.mxu0 0
        %525 = vmatpush.bf16.msra.mxu0 0
        %526 = vmatpush.bf16.msra.mxu0 0
        %527 = vmatpush.bf16.msra.mxu0 0
        %528 = vmatpush.bf16.msra.mxu0 %v520
        %529 = vmatpush.bf16.msra.mxu0 %v513
        %530 = vmatmul.bf16.gmra.mxu0 %v517
        %v531 = vpop.f32.mrf.mxu0
        %v532 = vadd.f32 0.0, %v531
        %v533 = vpop.f32.mrf.mxu0
        %534 = vdwg.mxu0
        %v535 = vadd.f32 %v501, %v532
        %536 = vrot.lane.b32.xlu0 %v439, 116
        %v537 = vpop.permute.xlu0 %536
        %538 = vrot.lane.b32.xlu0 %v440, 116
        %v539 = vpop.permute.xlu0 %538
        %540 = vrot.lane.b32.xlu0 %v441, 116
        %v541 = vpop.permute.xlu0 %540
        %542 = vrot.lane.b32.xlu0 %v442, 116
        %v543 = vpop.permute.xlu0 %542
        %vm544 = vcmask 949248
        %v545 = vsel %vm544, %v537, %v539
        %v546 = vsel %vm544, %v541, %v543
        %v549 = vsel %vm455, %v411, 0
        %v552 = vsel %vm459, %v546, 0
        %554 = vmatpush.bf16.msra.mxu0 0
        %555 = vmatpush.bf16.msra.mxu0 0
        %556 = vmatpush.bf16.msra.mxu0 0
        %557 = vmatpush.bf16.msra.mxu0 0
        %558 = vmatpush.bf16.msra.mxu0 0
        %559 = vmatpush.bf16.msra.mxu0 0
        %560 = vmatpush.bf16.msra.mxu0 %v552
        %561 = vmatpush.bf16.msra.mxu0 %v545
        %562 = vmatmul.bf16.gmra.mxu0 %v549
        %v563 = vpop.f32.mrf.mxu0
        %v564 = vadd.f32 0.0, %v563
        %v565 = vpop.f32.mrf.mxu0
        %566 = vdwg.mxu0
        %v567 = vadd.f32 %v535, %v564
        %568 = vrot.lane.b32.xlu0 %v439, 115
        %v569 = vpop.permute.xlu0 %568
        %570 = vrot.lane.b32.xlu0 %v440, 115
        %v571 = vpop.permute.xlu0 %570
        %572 = vrot.lane.b32.xlu0 %v441, 115
        %v573 = vpop.permute.xlu0 %572
        %574 = vrot.lane.b32.xlu0 %v442, 115
        %v575 = vpop.permute.xlu0 %574
        %vm576 = vcmask 941056
        %v577 = vsel %vm576, %v569, %v571
        %v578 = vsel %vm576, %v573, %v575
        %v581 = vsel %vm455, %v413, 0
        %v584 = vsel %vm459, %v578, 0
        %586 = vmatpush.bf16.msra.mxu0 0
        %587 = vmatpush.bf16.msra.mxu0 0
        %588 = vmatpush.bf16.msra.mxu0 0
        %589 = vmatpush.bf16.msra.mxu0 0
        %590 = vmatpush.bf16.msra.mxu0 0
        %591 = vmatpush.bf16.msra.mxu0 0
        %592 = vmatpush.bf16.msra.mxu0 %v584
        %593 = vmatpush.bf16.msra.mxu0 %v577
        %594 = vmatmul.bf16.gmra.mxu0 %v581
        %v595 = vpop.f32.mrf.mxu0
        %v596 = vadd.f32 0.0, %v595
        %v597 = vpop.f32.mrf.mxu0
        %598 = vdwg.mxu0
        %v599 = vadd.f32 %v567, %v596
        %600 = vrot.lane.b32.xlu0 %v439, 114
        %v601 = vpop.permute.xlu0 %600
        %602 = vrot.lane.b32.xlu0 %v440, 114
        %v603 = vpop.permute.xlu0 %602
        %604 = vrot.lane.b32.xlu0 %v441, 114
        %v605 = vpop.permute.xlu0 %604
        %606 = vrot.lane.b32.xlu0 %v442, 114
        %v607 = vpop.permute.xlu0 %606
        %vm608 = vcmask 932864
        %v609 = vsel %vm608, %v601, %v603
        %v610 = vsel %vm608, %v605, %v607
        %v613 = vsel %vm455, %v415, 0
        %v616 = vsel %vm459, %v610, 0
        %618 = vmatpush.bf16.msra.mxu0 0
        %619 = vmatpush.bf16.msra.mxu0 0
        %620 = vmatpush.bf16.msra.mxu0 0
        %621 = vmatpush.bf16.msra.mxu0 0
        %622 = vmatpush.bf16.msra.mxu0 0
        %623 = vmatpush.bf16.msra.mxu0 0
        %624 = vmatpush.bf16.msra.mxu0 %v616
        %625 = vmatpush.bf16.msra.mxu0 %v609
        %626 = vmatmul.bf16.gmra.mxu0 %v613
        %v627 = vpop.f32.mrf.mxu0
        %v628 = vadd.f32 0.0, %v627
        %v629 = vpop.f32.mrf.mxu0
        %630 = vdwg.mxu0
        %v631 = vadd.f32 %v599, %v628
        %632 = vrot.lane.b32.xlu0 %v439, 104
        %v633 = vpop.permute.xlu0 %632
        %634 = vrot.lane.b32.xlu0 %v440, 104
        %v635 = vpop.permute.xlu0 %634
        %636 = vrot.lane.b32.xlu0 %v441, 104
        %v637 = vpop.permute.xlu0 %636
        %638 = vrot.lane.b32.xlu0 %v442, 104
        %v639 = vpop.permute.xlu0 %638
        %vm640 = vcmask 850944
        %v641 = vsel %vm640, %v633, %v635
        %v642 = vsel %vm640, %v637, %v639
        %v645 = vsel %vm455, %v417, 0
        %v648 = vsel %vm459, %v642, 0
        %650 = vmatpush.bf16.msra.mxu0 0
        %651 = vmatpush.bf16.msra.mxu0 0
        %652 = vmatpush.bf16.msra.mxu0 0
        %653 = vmatpush.bf16.msra.mxu0 0
        %654 = vmatpush.bf16.msra.mxu0 0
        %655 = vmatpush.bf16.msra.mxu0 0
        %656 = vmatpush.bf16.msra.mxu0 %v648
        %657 = vmatpush.bf16.msra.mxu0 %v641
        %658 = vmatmul.bf16.gmra.mxu0 %v645
        %v659 = vpop.f32.mrf.mxu0
        %v660 = vadd.f32 0.0, %v659
        %v661 = vpop.f32.mrf.mxu0
        %662 = vdwg.mxu0
        %v663 = vadd.f32 %v631, %v660
        %664 = vrot.lane.b32.xlu0 %v439, 103
        %v665 = vpop.permute.xlu0 %664
        %666 = vrot.lane.b32.xlu0 %v440, 103
        %v667 = vpop.permute.xlu0 %666
        %668 = vrot.lane.b32.xlu0 %v441, 103
        %v669 = vpop.permute.xlu0 %668
        %670 = vrot.lane.b32.xlu0 %v442, 103
        %v671 = vpop.permute.xlu0 %670
        %vm672 = vcmask 842752
        %v673 = vsel %vm672, %v665, %v667
        %v674 = vsel %vm672, %v669, %v671
        %v677 = vsel %vm455, %v419, 0
        %v680 = vsel %vm459, %v674, 0
        %682 = vmatpush.bf16.msra.mxu0 0
        %683 = vmatpush.bf16.msra.mxu0 0
        %684 = vmatpush.bf16.msra.mxu0 0
        %685 = vmatpush.bf16.msra.mxu0 0
        %686 = vmatpush.bf16.msra.mxu0 0
        %687 = vmatpush.bf16.msra.mxu0 0
        %688 = vmatpush.bf16.msra.mxu0 %v680
        %689 = vmatpush.bf16.msra.mxu0 %v673
        %690 = vmatmul.bf16.gmra.mxu0 %v677
        %v691 = vpop.f32.mrf.mxu0
        %v692 = vadd.f32 0.0, %v691
        %v693 = vpop.f32.mrf.mxu0
        %694 = vdwg.mxu0
        %v695 = vadd.f32 %v663, %v692
        %696 = vrot.lane.b32.xlu0 %v439, 102
        %v697 = vpop.permute.xlu0 %696
        %698 = vrot.lane.b32.xlu0 %v440, 102
        %v699 = vpop.permute.xlu0 %698
        %700 = vrot.lane.b32.xlu0 %v441, 102
        %v701 = vpop.permute.xlu0 %700
        %702 = vrot.lane.b32.xlu0 %v442, 102
        %v703 = vpop.permute.xlu0 %702
        %vm704 = vcmask 834560
        %v705 = vsel %vm704, %v697, %v699
        %v706 = vsel %vm704, %v701, %v703
        %v709 = vsel %vm455, %v421, 0
        %v712 = vsel %vm459, %v706, 0
        %714 = vmatpush.bf16.msra.mxu0 0
        %715 = vmatpush.bf16.msra.mxu0 0
        %716 = vmatpush.bf16.msra.mxu0 0
        %717 = vmatpush.bf16.msra.mxu0 0
        %718 = vmatpush.bf16.msra.mxu0 0
        %719 = vmatpush.bf16.msra.mxu0 0
        %720 = vmatpush.bf16.msra.mxu0 %v712
        %721 = vmatpush.bf16.msra.mxu0 %v705
        %722 = vmatmul.bf16.gmra.mxu0 %v709
        %v723 = vpop.f32.mrf.mxu0
        %v724 = vadd.f32 0.0, %v723
        %v725 = vpop.f32.mrf.mxu0
        %726 = vdwg.mxu0
        %v727 = vadd.f32 %v695, %v724
        %729 = vset.pattern.permute.xlu0 0
        %730 = vperm.xlu0 %729, %v422
        %v731 = vpop.permute.xlu0 %730
        %v733 = vmul.f32 %v727, %v731
        %735 = vset.pattern.permute.xlu0 0
        %736 = vperm.xlu0 %735, %v423
        %v737 = vpop.permute.xlu0 %736
        %v739 = vadd.f32 %v733, %v737
        %v740 = vmax.f32 %v739, 0.0
        %741 = vst [vmem:[%s395] sm:$0xff] %v740
        %s742 = sand.u32 %s200, 1
        %s743 = scalar_lea.sflag [#allocation5], %s742
        %s744 = sand.u32 %s200, 1
        %s745 = smul.addr %s744, 8
        %s746 = scalar_lea.vmem [#allocation11], %s745
        // Predicated region
        $region61: #{tpu_custom_call.1} parent=43 // pred_check
          %p747 = pneg %p210
        $region62: #{tpu_custom_call.1} parent=43 // pred_check_branch
          %749 = sbr.rel (%p747) target = $region64
        $region63: #{tpu_custom_call.1} parent=43 // pred_region
          %751 = vsyncadd %s743, 0
          %s752 = smul.addr %s31, 10
          %s753 = sadd.s32 %s32, %s752
          %s754 = smul.addr %s753, 8
          %s755 = scalar_lea.hbm %s6, %s754
          %s757 = sshll.u32 %s746, 4
          %s758 = int_to_ptr.vmem [resolvable:$true] %s757
          %s759 = sshll.u32 %s755, 4
          %s760 = int_to_ptr.hbm [resolvable:$true] %s759
          %762 = dma.vmem_to_hbm [thread:$0]  %s758, 128, %s760, %s743
        $region64: #{tpu_custom_call.1} parent=43 // pred_fallthru
          _
      $region44: #{tpu_custom_call.1} parent=5 // pred_fallthru
        _
      %p763 = scmp.le.s32.totalorder 2, %s22
      // Predicated region
      $region65: #{tpu_custom_call.1} parent=5 // pred_check
        %p764 = pneg %p763
      $region66: #{tpu_custom_call.1} parent=5 // pred_check_branch
        %766 = sbr.rel (%p764) target = $region68
      $region67: #{tpu_custom_call.1} parent=5 // pred_region
        %s767 = ssub.s32 %s22, 2
        // Predicated region
        $region69: #{tpu_custom_call.1} parent=67 // pred_check
          %p768 = pneg %p216
        $region70: #{tpu_custom_call.1} parent=67 // pred_check_branch
          %770 = sbr.rel (%p768) target = $region72
        $region71: #{tpu_custom_call.1} parent=67 // pred_region
          %s771 = sand.u32 %s201, 1
          %s772 = scalar_lea.sflag [#allocation5], %s771
          %s773 = sand.u32 %s201, 1
          %s774 = smul.addr %s773, 8
          %s775 = scalar_lea.vmem [#allocation11], %s774
          %777 = dma.done %s772, 128
        $region72: #{tpu_custom_call.1} parent=67 // pred_fallthru
          _
      $region68: #{tpu_custom_call.1} parent=5 // pred_fallthru
        _
    $region6: #{tpu_custom_call.1} parent=1 // loop_footer
      %s26 = sadd.s32 1, %s22
    $region7: #{tpu_custom_call.1} parent=1 // loop_footer_branch
      %21 = sbr.rel target = $region3
    $region8: #{tpu_custom_call.1} parent=1 // loop_exit
      _
    %778 = vsyncpa [#allocation4], 1
    %s779 = scalar_lea.sflag [#allocation4], 1
    %780 = vsyncpa %s779, 1
    %781 = vsyncpa [#allocation7], 1
    %s782 = scalar_lea.sflag [#allocation7], 1
    %783 = vsyncpa %s782, 1
    %784 = vsyncpa [#allocation10], 1
    %785 = vsyncpa [#allocation5], 1
    %s786 = scalar_lea.sflag [#allocation5], 1
    %787 = vsyncpa %s786, 1

</llo_original>
